<compile_context>
chip_gen: v5e
topology: v5e:2x2
jax: 0.10.0
libtpu: 0.0.40
codegen_flags: <defaults>
</compile_context>

<pallas_src>
import functools

import jax
import jax.numpy as jnp
from jax.experimental import pallas as pl
from jax.experimental.pallas import tpu as pltpu

_MIB = 1024 * 1024


def _physical_vmem_bytes() -> int:
    """Best-effort physical VMEM query; conservative (v7x = 64 MiB) fallback."""
    try:
        info = pltpu.get_tpu_info()
        v = getattr(info, "vmem_capacity_bytes", None)
        if isinstance(v, int) and v > 0:
            return v
    except Exception:
        pass
    return 64 * _MIB


def _num_tensorcores() -> int:
    """Best-effort TensorCore count (v7x has 2); falls back to 1."""
    try:
        info = pltpu.get_tpu_info()
    except Exception:
        return 1
    for name in ("num_tensorcores", "tensorcore_count", "num_cores", "core_count"):
        v = getattr(info, name, None)
        if isinstance(v, int) and v >= 1:
            return max(1, min(int(v), 2))
    return 1


def _similarity_loss_kernel(p_ref, o_ref, acc_ref, *,
                            threshold, batch, block_rows, tiles_per_core):
    c = pl.program_id(0)          # core-parallel axis
    i = pl.program_id(1)          # per-core reduction over batch tiles

    @pl.when(i == 0)
    def _init():
        acc_ref[...] = jnp.zeros_like(acc_ref)

    # Logical (unclamped) tile index — drives row-validity masking only.
    t = c * tiles_per_core + i

    p = p_ref[...].astype(jnp.float32)            # (TB, N); cast after load

    # Minimal full-width work: cmp, cvt, select, mul.
    above = p >= threshold                        # (TB, N)
    above_f = above.astype(jnp.float32)
    p_sel = jnp.where(above, p, 0.0)              # select: padding NaN/Inf can't leak

    cnt = jnp.sum(above_f, axis=1, keepdims=True)          # (TB, 1)
    s1 = jnp.sum(p_sel, axis=1, keepdims=True)             # (TB, 1)
    s2 = jnp.sum(p_sel * p_sel, axis=1, keepdims=True)     # (TB, 1)

    # sum_j where(above, (1/cnt - p)^2, 0) == (1 - 2*S1)/cnt + S2
    per_row = (1.0 - 2.0 * s1) / cnt + s2                  # (TB, 1)

    # Row masking on the narrow (TB, 1) column only (selects, never multiplies).
    row_ids = t * block_rows + jax.lax.broadcasted_iota(jnp.int32, (block_rows, 1), 0)
    row_valid = row_ids < batch
    per_row = jnp.where(row_valid,
                        jnp.where(cnt == 0.0, jnp.nan, per_row),  # torch: 0/0 renorm -> NaN
                        0.0)

    acc_ref[...] += jnp.sum(per_row)              # (1,1) VMEM accumulator

    @pl.when(i == tiles_per_core - 1)
    def _finalize():
        # Lane-dense (8,128) per-core output block; partial is read back at [c*8, 0].
        o_ref[...] = jnp.broadcast_to(acc_ref[...], o_ref.shape)


def similarity_constraint_loss(predictions: jax.Array,
                               threshold: float = 0.5,
                               block_rows: int | None = None,
                               num_cores: int | None = None) -> jax.Array:
    """Pallas implementation of SimilarityConstraintLoss.forward.

    predictions: (B, N) float array. Returns a scalar float32 loss.
    """
    B, N = predictions.shape
    itemsize = jnp.dtype(predictions.dtype).itemsize

    phys_vmem = _physical_vmem_bytes()
    if num_cores is None:
        num_cores = _num_tensorcores()

    if block_rows is None:
        # dtype-aware tile sizing: one input tile <= min(16 MiB, physVMEM/4).
        tile_budget = max(1 * _MIB, min(16 * _MIB, phys_vmem // 4))
        block_rows = max(8, (tile_budget // (N * itemsize)) // 8 * 8)
    if block_rows >= B:
        block_rows = B                               # single tile; full-dim block is legal
    else:
        block_rows = max(8, (block_rows // 8) * 8)   # sublane dim multiple of 8

    n_tiles = pl.cdiv(B, block_rows)
    num_cores = max(1, min(int(num_cores), n_tiles))
    tiles_per_core = pl.cdiv(n_tiles, num_cores)

    if num_cores * tiles_per_core == n_tiles:
        in_index = lambda c, i: (c * tiles_per_core + i, 0)
    else:
        # Phantom tiles (t >= n_tiles) are clamped to a valid DMA window and
        # fully masked in the kernel via row_valid.
        in_index = lambda c, i: (jnp.where(c * tiles_per_core + i < n_tiles,
                                           c * tiles_per_core + i,
                                           n_tiles - 1), 0)

    # Explicit scoped-VMEM limit from the actual double-buffered footprint.
    tile_bytes = block_rows * N * itemsize
    vmem_limit = 2 * tile_bytes + 4 * _MIB
    vmem_limit = max(vmem_limit, 32 * _MIB)
    vmem_limit = min(vmem_limit, phys_vmem - 8 * _MIB)

    kernel = functools.partial(
        _similarity_loss_kernel,
        threshold=float(threshold),
        batch=B,
        block_rows=block_rows,
        tiles_per_core=tiles_per_core,
    )

    out = pl.pallas_call(
        kernel,
        out_shape=jax.ShapeDtypeStruct((num_cores * 8, 128), jnp.float32),
        grid_spec=pltpu.PrefetchScalarGridSpec(
            num_scalar_prefetch=0,
            grid=(num_cores, tiles_per_core),
            in_specs=[pl.BlockSpec((block_rows, N), in_index)],
            out_specs=pl.BlockSpec((8, 128), lambda c, i: (c, 0)),
            scratch_shapes=[pltpu.VMEM((1, 1), jnp.float32)],  # per-core running sum
        ),
        compiler_params=pltpu.CompilerParams(
            dimension_semantics=("parallel", "arbitrary"),
            vmem_limit_bytes=int(vmem_limit),
        ),
        cost_estimate=pl.CostEstimate(
            flops=6 * B * N,
            transcendentals=0,
            bytes_accessed=B * N * itemsize + num_cores * 8 * 128 * 4,
        ),
    )(predictions)

    partials = out[0::8, 0]                 # one partial per core
    return jnp.sum(partials) * (1.0 / B)


def _reference(predictions, threshold=0.5):
    # Pure-JAX reference mirroring the torch code.
    p = predictions.astype(jnp.float32)
    above = p >= threshold
    cnt = jnp.sum(above.astype(jnp.float32), axis=1, keepdims=True)
    equal = jnp.ones_like(p) / cnt
    sim = jnp.where(above, equal, 0.0)
    sim = sim / jnp.sum(sim, axis=1, keepdims=True)
    masked = jnp.where(above, p, 0.0)
    return jnp.mean(jnp.sum((sim - masked) ** 2, axis=1))


if __name__ == "__main__":
    key = jax.random.PRNGKey(0)
    k1, k2 = jax.random.split(key)

    # Test 1: single-tile path (block covers the whole batch), detected core count.
    B1, N1 = 8, 128
    p1 = jax.random.uniform(k1, (B1, N1), dtype=jnp.float32)
    loss1 = jax.block_until_ready(similarity_constraint_loss(p1, threshold=0.5))
    ref1 = _reference(p1, threshold=0.5)
    assert jnp.allclose(loss1, ref1, rtol=1e-5, atol=1e-5), (loss1, ref1)

    # Test 2: multi-tile path with a ragged last tile (B not a multiple of TB).
    B2, N2 = 20, 256
    p2 = jax.random.uniform(k2, (B2, N2), dtype=jnp.float32)
    loss2 = jax.block_until_ready(
        similarity_constraint_loss(p2, threshold=0.5, block_rows=8))
    ref2 = _reference(p2, threshold=0.5)
    assert jnp.allclose(loss2, ref2, rtol=1e-5, atol=1e-5), (loss2, ref2)

    # Test 3: forced two-way core split (odd tile count -> one clamped phantom
    # tile, per-core partial outputs summed outside).
    loss3 = jax.block_until_ready(
        similarity_constraint_loss(p2, threshold=0.5, block_rows=8, num_cores=2))
    assert jnp.allclose(loss3, ref2, rtol=1e-5, atol=1e-5), (loss3, ref2)

    print("KERNEL_OK")
</pallas_src>

<mosaic_0001>
module attributes {stable_mosaic.version = 11 : i64} {
  func.func @_similarity_loss_kernel(%arg0: i32, %arg1: i32, %arg2: memref<8x128xf32, #tpu.memory_space<vmem>>, %arg3: memref<8x128xf32, #tpu.memory_space<vmem>>, %arg4: memref<1x1xf32, #tpu.memory_space<vmem>>) attributes {dimension_semantics = [#tpu.dimension_semantics<parallel>, #tpu.dimension_semantics<arbitrary>], iteration_bounds = array<i64: 1, 1>, scalar_prefetch = 0 : i64, scratch_operands = 1 : i64, tpu.core_type = #tpu.core_type<tc>, window_params = [{transform_indices = @transform_0, window_bounds = array<i64: 8, 128>}, {transform_indices = @transform_1, window_bounds = array<i64: 8, 128>}]} {
    %c0_i32 = arith.constant 0 : i32
    %0 = arith.cmpi eq, %arg1, %c0_i32 : i32
    %1 = arith.extui %0 : i1 to i32
    %c0_i32_0 = arith.constant 0 : i32
    %2 = arith.cmpi ne, %1, %c0_i32_0 : i32
    scf.if %2 {
      %cst_19 = arith.constant 0.000000e+00 : f32
      %48 = vector.broadcast %cst_19 : f32 to vector<1x1xf32>
      %c0_20 = arith.constant 0 : index
      %c0_21 = arith.constant 0 : index
      %49 = vector.load %arg4[%c0_20, %c0_21] : memref<1x1xf32, #tpu.memory_space<vmem>>, vector<1x1xf32>
      tpu.vector_store %arg4[%c0_20, %c0_21], %48 {strides = array<i32>} : memref<1x1xf32, #tpu.memory_space<vmem>>, vector<1x1xf32>,
    } else {
    }
    %c1_i32 = arith.constant 1 : i32
    %3 = arith.muli %arg0, %c1_i32 : i32
    %4 = arith.addi %3, %arg1 : i32
    %c0 = arith.constant 0 : index
    %c0_1 = arith.constant 0 : index
    %5 = vector.load %arg2[%c0, %c0_1] : memref<8x128xf32, #tpu.memory_space<vmem>>, vector<8x128xf32>
    %cst = arith.constant 5.000000e-01 : f32
    %6 = vector.broadcast %cst : f32 to vector<8x128xf32>
    %7 = arith.cmpf oge, %5, %6 : vector<8x128xf32>
    %8 = arith.extui %7 : vector<8x128xi1> to vector<8x128xi32>
    %9 = arith.sitofp %8 : vector<8x128xi32> to vector<8x128xf32>
    %cst_2 = arith.constant 0.000000e+00 : f32
    %10 = vector.broadcast %cst_2 : f32 to vector<8x128xf32>
    %11 = arith.select %7, %5, %10 : vector<8x128xi1>, vector<8x128xf32>
    %cst_3 = arith.constant dense<0.000000e+00> : vector<8xf32>
    %12 = vector.multi_reduction <add>, %9, %cst_3 [1] : vector<8x128xf32> to vector<8xf32>
    %13 = vector.shape_cast %12 : vector<8xf32> to vector<8x1xf32>
    %cst_4 = arith.constant dense<0.000000e+00> : vector<8xf32>
    %14 = vector.multi_reduction <add>, %11, %cst_4 [1] : vector<8x128xf32> to vector<8xf32>
    %15 = vector.shape_cast %14 : vector<8xf32> to vector<8x1xf32>
    %16 = arith.mulf %11, %11 : vector<8x128xf32>
    %cst_5 = arith.constant dense<0.000000e+00> : vector<8xf32>
    %17 = vector.multi_reduction <add>, %16, %cst_5 [1] : vector<8x128xf32> to vector<8xf32>
    %18 = vector.shape_cast %17 : vector<8xf32> to vector<8x1xf32>
    %cst_6 = arith.constant 2.000000e+00 : f32
    %19 = vector.broadcast %cst_6 : f32 to vector<8x1xf32>
    %20 = arith.mulf %19, %15 : vector<8x1xf32>
    %cst_7 = arith.constant 1.000000e+00 : f32
    %21 = vector.broadcast %cst_7 : f32 to vector<8x1xf32>
    %22 = arith.subf %21, %20 : vector<8x1xf32>
    %23 = arith.divf %22, %13 : vector<8x1xf32>
    %24 = arith.addf %23, %18 : vector<8x1xf32>
    %c8_i32 = arith.constant 8 : i32
    %25 = arith.muli %4, %c8_i32 : i32
    %26 = tpu.iota {dimensions = array<i32: 0>} : vector<8x1xi32>
    %27 = vector.broadcast %25 : i32 to vector<8x1xi32>
    %28 = arith.addi %27, %26 : vector<8x1xi32>
    %c8_i32_8 = arith.constant 8 : i32
    %29 = vector.broadcast %c8_i32_8 : i32 to vector<8x1xi32>
    %30 = arith.cmpi slt, %28, %29 : vector<8x1xi32>
    %cst_9 = arith.constant 0.000000e+00 : f32
    %31 = vector.broadcast %cst_9 : f32 to vector<8x1xf32>
    %32 = arith.cmpf oeq, %13, %31 : vector<8x1xf32>
    %cst_10 = arith.constant 0x7FC00000 : f32
    %33 = vector.broadcast %cst_10 : f32 to vector<8x1xf32>
    %34 = arith.select %32, %33, %24 : vector<8x1xi1>, vector<8x1xf32>
    %cst_11 = arith.constant 0.000000e+00 : f32
    %35 = vector.broadcast %cst_11 : f32 to vector<8x1xf32>
    %36 = arith.select %30, %34, %35 : vector<8x1xi1>, vector<8x1xf32>
    %c0_12 = arith.constant 0 : index
    %c0_13 = arith.constant 0 : index
    %37 = vector.load %arg4[%c0_12, %c0_13] : memref<1x1xf32, #tpu.memory_space<vmem>>, vector<1x1xf32>
    %38 = vector.shape_cast %36 : vector<8x1xf32> to vector<1x8x1xf32>
    %cst_14 = arith.constant dense<0.000000e+00> : vector<1xf32>
    %39 = vector.multi_reduction <add>, %38, %cst_14 [1, 2] : vector<1x8x1xf32> to vector<1xf32>
    %40 = vector.shape_cast %39 : vector<1xf32> to vector<1x1x1xf32>
    %41 = vector.extract %40[0, 0, 0] : f32 from vector<1x1x1xf32>
    %42 = vector.broadcast %41 : f32 to vector<1x1xf32>
    %43 = arith.addf %37, %42 : vector<1x1xf32>
    %c0_15 = arith.constant 0 : index
    %c0_16 = arith.constant 0 : index
    %44 = vector.load %arg4[%c0_15, %c0_16] : memref<1x1xf32, #tpu.memory_space<vmem>>, vector<1x1xf32>
    tpu.vector_store %arg4[%c0_15, %c0_16], %43 {strides = array<i32>} : memref<1x1xf32, #tpu.memory_space<vmem>>, vector<1x1xf32>,
    %c0_i32_17 = arith.constant 0 : i32
    %45 = arith.cmpi eq, %arg1, %c0_i32_17 : i32
    %46 = arith.extui %45 : i1 to i32
    %c0_i32_18 = arith.constant 0 : i32
    %47 = arith.cmpi ne, %46, %c0_i32_18 : i32
    scf.if %47 {
      %c0_19 = arith.constant 0 : index
      %c0_20 = arith.constant 0 : index
      %48 = vector.load %arg4[%c0_19, %c0_20] : memref<1x1xf32, #tpu.memory_space<vmem>>, vector<1x1xf32>
      %49 = vector.shape_cast %48 : vector<1x1xf32> to vector<1x1xf32>
      %50 = vector.broadcast %49 : vector<1x1xf32> to vector<8x128xf32>
      %c0_21 = arith.constant 0 : index
      %c0_22 = arith.constant 0 : index
      %51 = vector.load %arg3[%c0_21, %c0_22] : memref<8x128xf32, #tpu.memory_space<vmem>>, vector<8x128xf32>
      tpu.vector_store %arg3[%c0_21, %c0_22], %50 {strides = array<i32>} : memref<8x128xf32, #tpu.memory_space<vmem>>, vector<8x128xf32>,
    } else {
    }
    return
  }
  func.func @transform_0(%arg0: i32, %arg1: i32) -> (i32, i32) {
    %c1_i32 = arith.constant 1 : i32
    %0 = arith.muli %arg0, %c1_i32 : i32
    %1 = arith.addi %0, %arg1 : i32
    %c0_i32 = arith.constant 0 : i32
    %c0_i32_0 = arith.constant 0 : i32
    return %1, %c0_i32 : i32, i32
  }
  func.func @transform_1(%arg0: i32, %arg1: i32) -> (i32, i32) {
    %c0_i32 = arith.constant 0 : i32
    %c0_i32_0 = arith.constant 0 : i32
    return %arg0, %c0_i32 : i32, i32
  }
}

</mosaic_0001>

<llo_original>
// kernel: tpu_custom_call.1
$region0: #{tpu_custom_call.1}
  #allocation0 [shape = 'u32[]', space=smem, size = 0x4, offset = 0x4, fixed_abs, tag = 'smem constant byte address 0x4 - core index']
  #allocation1 [shape = 'u32[72,128]{1,0:T(1,128)}', space=vmem, size = 0x9000, scoped, tag = 'internal scratch']
  #allocation2 [shape = 'f32[1,1]{1,0:T(1,128)}', space=vmem, size = 0x200, scoped, tag = 'scratch operand']
  %s0 = inlined_call_operand.hbm [shape: f32[8,128], index: 0, kind: input, shape index: {}]
  %s1 = inlined_call_operand.hbm [shape: f32[8,128], index: 1, kind: output, shape index: {}]
  %s2 = sld [smem:[#allocation0]]
  $region26: #{tpu_custom_call.1} parent=0
    _
  %s4 = ssub.s32 1, %s2
  %s5 = scalar_select 0, %s4, %s2
  $region1: #{tpu_custom_call.1} parent=0
    #allocation3 [shape = 'u8[4096]{0}', space=vmem, size = 0x1000, scoped, tag = 'input window, operand 0, single buffered']
    #allocation4 [shape = 's32[1]{0}', space=sflag, size = 0x4, scoped, tag = 'scoped memory for tpu_custom_call.1']
    #allocation5 [shape = 's32[1]{0}', space=sflag, size = 0x4, scoped, tag = 'scoped memory for tpu_custom_call.1']
    #allocation6 [shape = 'u8[4096]{0}', space=vmem, size = 0x1000, scoped, tag = 'output window, operand 0, single buffered']
    %6 = vsyncpa [#allocation4], 0
    %7 = vsyncpa [#allocation5], 0
    // Predicated region
    $region2: #{tpu_custom_call.1} parent=1 // pred_check
      _
    $region3: #{tpu_custom_call.1} parent=1 // pred_check_branch
      %9 = sbr.rel (0) target = $region5
    $region4: #{tpu_custom_call.1} parent=1 // pred_region
      %s10 = sadd.s32 0, 0
      %12 = vsyncadd [#allocation4], 0
      %s13 = smul.addr %s10, 8
      %s14 = scalar_lea.hbm %s0, %s13
      %s16 = sshll.u32 %s14, 4
      %s17 = int_to_ptr.hbm [resolvable:$true] %s16
      %s18 = sshll.u32 [#allocation3], 4
      %s19 = int_to_ptr.vmem [resolvable:$true] %s18
      %21 = dma.hbm_to_vmem [thread:$0]  %s17, 128, %s19, [#allocation4]
    $region5: #{tpu_custom_call.1} parent=1 // pred_fallthru
      _
    // Predicated region
    $region6: #{tpu_custom_call.1} parent=1 // pred_check
      _
    $region7: #{tpu_custom_call.1} parent=1 // pred_check_branch
      %23 = sbr.rel (0) target = $region9
    $region8: #{tpu_custom_call.1} parent=1 // pred_region
      %25 = dma.done [#allocation4], 128
    $region9: #{tpu_custom_call.1} parent=1 // pred_fallthru
      _
    %s26 = sadd.s32 0, 0
    %p27 = scmp.eq.s32.totalorder 0, 0
    // Predicated region
    $region10: #{tpu_custom_call.1} parent=1 // pred_check
      %p28 = pneg %p27
    $region11: #{tpu_custom_call.1} parent=1 // pred_check_branch
      %30 = sbr.rel (%p28) target = $region13
    $region12: #{tpu_custom_call.1} parent=1 // pred_region
      %vm31 = vcmask 0
      %32 = vst.msk [vmem:[#allocation2] sm:$0x1] %vm31, 0.0
    $region13: #{tpu_custom_call.1} parent=1 // pred_fallthru
      _
    %s33 = sadd.s32 0, 0
    %v34 = vld [vmem:[#allocation3] sm:$0xff]
    %vm35 = vcmp.ge.f32.partialorder %v34, 0.5
    %v36 = vsel %vm35, 1, 0
    %v37 = vcvt.s32.f32 %v36
    %v38 = vsel %vm35, %v34, 0.0
    %39 = vadd.xlane.f32.xlu0 %v37
    %v40 = vpop.xlane.xlu0 %39
    %41 = vadd.xlane.f32.xlu0 %v38
    %v42 = vpop.xlane.xlu0 %41
    %v43 = vmul.f32 %v38, %v38
    %44 = vadd.xlane.f32.xlu0 %v43
    %v45 = vpop.xlane.xlu0 %44
    %v46 = vmul.f32 %v42, 2.0
    %v47 = vsub.f32 1.0, %v46
    %v48 = vrcp.pop %v40
    %v49 = vmul.f32 %v40, %v48
    %v50 = vsub.f32 1.0, %v49
    %v51 = vmul.f32 %v48, %v50
    %v52 = vadd.f32 %v48, %v51
    %vm53 = vweird.f32 %v40
    %vm54 = vweird.f32 %v48
    %vm55 = vmor %vm53, %vm54
    %v56 = vsel %vm55, %v48, %v52
    %v57 = vand.u32 2147483647, %v40
    %vm58 = vcmp.eq.f32.partialorder %v57, 8.507059e+37
    %v59 = vand.u32 %v40, 2147483648
    %v60 = vor.u32 1.1754944e-38, %v59
    %v61 = vsel %vm58, %v60, %v56
    %v62 = vmul.f32 %v47, %v61
    %v63 = vadd.f32 %v62, %v45
    %s64 = smul.u32 %s33, 8
    %v65 = vlaneseq
    %v66 = vshrl.u32 %v65, 7
    %v67 = vstv %s64
    %v68 = vadd.s32 %v67, %v66
    %vm69 = vcmp.lt.s32.totalorder %v68, 8
    %vm70 = vcmp.eq.f32.partialorder %v40, 0.0
    %v71 = vsel %vm70, nan, %v63
    %v72 = vsel %vm69, %v71, 0.0
    %v73 = vld [vmem:[#allocation2] sm:$0x1]
    %vm74 = vcmask 7168
    %v75 = vsel %vm74, %v72, 0.0
    %76 = vadd.xlane.f32.xlu0 %v75
    %v77 = vpop.xlane.xlu0 %76
    %v78 = vrot.slane %v77, 4
    %v79 = vadd.f32 %v77, %v78
    %v80 = vrot.slane %v79, 2
    %v81 = vadd.f32 %v79, %v80
    %v82 = vrot.slane %v81, 1
    %v83 = vadd.f32 %v81, %v82
    %s84 = vtos %v83
    %v85 = vstv %s84
    %v86 = vadd.f32 %v73, %v85
    %vm87 = vcmask 0
    %88 = vst.msk [vmem:[#allocation2] sm:$0x1] %vm87, %v86
    // Predicated region
    $region14: #{tpu_custom_call.1} parent=1 // pred_check
      %p89 = pneg %p27
    $region15: #{tpu_custom_call.1} parent=1 // pred_check_branch
      %91 = sbr.rel (%p89) target = $region17
    $region16: #{tpu_custom_call.1} parent=1 // pred_region
      %v92 = vld [vmem:[#allocation2] sm:$0x1]
      %v94 = vperm.slane %v92, 0
      %95 = vset.pattern.permute.xlu0 0
      %96 = vperm.xlu0 %95, %v94
      %v97 = vpop.permute.xlu0 %96
      %99 = vst [vmem:[#allocation6] sm:$0xff] %v97
    $region17: #{tpu_custom_call.1} parent=1 // pred_fallthru
      _
    // Predicated region
    $region18: #{tpu_custom_call.1} parent=1 // pred_check
      _
    $region19: #{tpu_custom_call.1} parent=1 // pred_check_branch
      %101 = sbr.rel (0) target = $region21
    $region20: #{tpu_custom_call.1} parent=1 // pred_region
      %103 = vsyncadd [#allocation5], 0
      %s105 = sshll.u32 [#allocation6], 4
      %s106 = int_to_ptr.vmem [resolvable:$true] %s105
      %s107 = sshll.u32 %s1, 4
      %s108 = int_to_ptr.hbm [resolvable:$true] %s107
      %110 = dma.vmem_to_hbm [thread:$0]  %s106, 128, %s108, [#allocation5]
    $region21: #{tpu_custom_call.1} parent=1 // pred_fallthru
      _
    // Predicated region
    $region22: #{tpu_custom_call.1} parent=1 // pred_check
      _
    $region23: #{tpu_custom_call.1} parent=1 // pred_check_branch
      %112 = sbr.rel (0) target = $region25
    $region24: #{tpu_custom_call.1} parent=1 // pred_region
      %114 = dma.done [#allocation5], 128
    $region25: #{tpu_custom_call.1} parent=1 // pred_fallthru
      _
    %115 = vsyncpa [#allocation4], 1
    %116 = vsyncpa [#allocation5], 1

</llo_original>
